<compile_context>
chip_gen: v6e
topology: v6e:2x2x1
jax: 0.10.0
libtpu: 0.0.40
codegen_flags: <defaults>
</compile_context>

<pallas_src>
import functools

import jax
import jax.numpy as jnp
from jax.experimental import pallas as pl
from jax.experimental.pallas import tpu as pltpu


# ---------------------------------------------------------------------------
# Synthetic config (the original reads a global `config` module).
# ---------------------------------------------------------------------------
class _Config:
    # TODO(synk): real value comes from the external config module.
    loss_weight_tik = 1.0


config = _Config()

# Synthetic BFM dimensions.
DIM_SHP = 99                    # shape coefficients used (pred_shape[:, 0:99])
DIM_EXP = 29                    # expression coefficients (pred_camera_exp[:, 7:36])
DIM_ALPHA = DIM_SHP + DIM_EXP   # 128 -> MXU-aligned contraction dim
NVER = 128                      # synthetic #vertices of the full model
N_LM = 68                       # 68 facial landmarks
LMP = 128                       # landmarks padded to one full lane group / coord

VMEM = pltpu.MemorySpace.VMEM


# ---------------------------------------------------------------------------
# Single fused Pallas kernel: whole mixed_loss_batch forward.
# ---------------------------------------------------------------------------
def _mixed_loss_kernel(alpha_ref, cam_ref, basis_ref, mu_ref, gt_ref, out_ref,
                       *, loss_weight_tik):
    """Fused forward.

    alpha_ref : (B, 128)     f32   [shape_para | exp_para]
    cam_ref   : (B, 7)       f32   quaternion (4) + translation (3)
    basis_ref : (128, 3*LMP) bf16  landmark-only basis, x|y|z lane groups
    mu_ref    : (1, 3*LMP)   f32   landmark-only mean shape, same layout
    gt_ref    : (2, B, N_LM) f32   gt 2D landmarks, coordinate-major
    out_ref   : (8, 128)     f32   lane-dense scalar output (loss broadcast)
    """
    alpha = alpha_ref[...]                                   # (B, 128) f32

    # --- 3DMM landmark vertices: V = alpha @ basis + mu  (bf16 MXU, f32 acc).
    v = jnp.dot(alpha.astype(jnp.bfloat16), basis_ref[...],
                preferred_element_type=jnp.float32) + mu_ref[...]   # (B, 3*LMP)
    vx = v[:, 0 * LMP:1 * LMP]                               # aligned lane groups
    vy = v[:, 1 * LMP:2 * LMP]
    vz = v[:, 2 * LMP:3 * LMP]

    # --- camera: normalized-quaternion rotation (first two rows) + 2D offset,
    #     fused in-kernel as per-sample (B, 1) broadcasts.
    cam = cam_ref[...]                                       # (B, 7)
    q0, q1, q2, q3 = cam[:, 0:1], cam[:, 1:2], cam[:, 2:3], cam[:, 3:4]
    tx, ty = cam[:, 4:5], cam[:, 5:6]
    inv_n = jax.lax.rsqrt(jnp.maximum(q0 * q0 + q1 * q1 + q2 * q2 + q3 * q3,
                                      1e-16))
    q0, q1, q2, q3 = q0 * inv_n, q1 * inv_n, q2 * inv_n, q3 * inv_n
    r00 = q0 * q0 + q1 * q1 - q2 * q2 - q3 * q3
    r01 = 2.0 * (q1 * q2 - q0 * q3)
    r02 = 2.0 * (q1 * q3 + q0 * q2)
    r10 = 2.0 * (q1 * q2 + q0 * q3)
    r11 = q0 * q0 - q1 * q1 + q2 * q2 - q3 * q3
    r12 = 2.0 * (q2 * q3 - q0 * q1)

    # TODO(synk): exact BFMA_batch camera model is external; weak-perspective
    # projection with unit scale is used here.
    px = (r00 * vx + r01 * vy + r02 * vz + tx)[:, :N_LM]     # (B, 68)
    py = (r10 * vx + r11 * vy + r12 * vz + ty)[:, :N_LM]

    # --- get_2d_landmark_loss: per-sample MSE over the 2 x 68 coordinates.
    # TODO(synk): exact external definition unknown; MSE per sample used.
    dx = px - gt_ref[0]
    dy = py - gt_ref[1]
    lm_loss = (jnp.sum(dx * dx, axis=-1, keepdims=True)
               + jnp.sum(dy * dy, axis=-1, keepdims=True)) * (1.0 / (2 * N_LM))

    # --- get_tikhonov_regularization: per-sample sum of squared coefficients.
    # TODO(synk): real version weights by the BFM eigenvalue sigmas (external).
    tik = jnp.sum(alpha * alpha, axis=-1, keepdims=True)     # (B, 1)

    # mixed_loss = lm_loss.reshape(-1, 1) + weight * tik ;  loss = mean(mixed)
    mixed = lm_loss + loss_weight_tik * tik                  # (B, 1)
    loss = jnp.mean(mixed)
    out_ref[...] = jnp.full((8, 128), loss, dtype=jnp.float32)


# ---------------------------------------------------------------------------
# Parameter construction (synthetic BFMA_batch stand-in, built once at init).
# ---------------------------------------------------------------------------
def _gather_landmark_basis(basis_full, mu_full, lm_idx):
    """Keep only the 68 landmark columns; lay out as x|y|z lane groups of 128."""
    d = basis_full.shape[0]
    b = basis_full.reshape(d, 3, NVER)[:, :, lm_idx]         # (D, 3, 68)
    b = jnp.pad(b, ((0, 0), (0, 0), (0, LMP - N_LM)))        # (D, 3, 128)
    m = mu_full.reshape(1, 3, NVER)[:, :, lm_idx]
    m = jnp.pad(m, ((0, 0), (0, 0), (0, LMP - N_LM)))
    return b.reshape(d, 3 * LMP), m.reshape(1, 3 * LMP)


def init_params(key):
    # TODO(synk): real BFM shape/expression bases, mean shape and 68-keypoint
    # indices are checkpoint data; deterministic synthetic stand-ins here.
    k_shp, k_exp, k_mu = jax.random.split(key, 3)
    scale = 1e-2
    w_shp = scale * jax.random.normal(k_shp, (DIM_SHP, 3 * NVER), jnp.float32)
    w_exp = scale * jax.random.normal(k_exp, (DIM_EXP, 3 * NVER), jnp.float32)
    mu = jax.random.normal(k_mu, (1, 3 * NVER), jnp.float32)
    lm_idx = jnp.arange(N_LM, dtype=jnp.int32)

    basis_full = jnp.concatenate([w_shp, w_exp], axis=0)     # (128, 3*NVER)
    basis_lm, mu_lm = _gather_landmark_basis(basis_full, mu, lm_idx)
    return {
        # bf16 bases: single-pass MXU on v5e, native fast path on v6e/v7x.
        "basis_lm": basis_lm.astype(jnp.bfloat16),           # (128, 384)
        "mu_lm": mu_lm.astype(jnp.float32),                  # (1, 384)
    }


# ---------------------------------------------------------------------------
# mixed_loss_batch.forward
# ---------------------------------------------------------------------------
def mixed_loss_forward(params, pred_camera_exp, pred_shape, gt_lable):
    """Forward pass of mixed_loss_batch as a single fused Pallas kernel."""
    shape_para = pred_shape[:, 0:DIM_SHP]
    exp_para = pred_camera_exp[:, 7:7 + DIM_EXP]
    camera_para = pred_camera_exp[:, 0:7]
    gt_2d_landmark = gt_lable["lm"].astype(jnp.float32)      # (B, 2, N_LM)
    _ = gt_lable["shape"]       # parsed by the original forward but unused

    alpha = jnp.concatenate([shape_para, exp_para], axis=1)  # (B, 128)
    gt_cm = jnp.transpose(gt_2d_landmark, (1, 0, 2))         # (2, B, N_LM)

    out = pl.pallas_call(
        functools.partial(_mixed_loss_kernel,
                          loss_weight_tik=float(config.loss_weight_tik)),
        out_shape=jax.ShapeDtypeStruct((8, 128), jnp.float32),
        in_specs=[pl.BlockSpec(memory_space=VMEM)] * 5,
        out_specs=pl.BlockSpec(memory_space=VMEM),
    )(alpha, camera_para, params["basis_lm"], params["mu_lm"], gt_cm)
    return out[0, 0]


# ---------------------------------------------------------------------------
if __name__ == "__main__":
    key = jax.random.PRNGKey(0)
    k_param, k_data = jax.random.split(key)
    params = init_params(k_param)

    B = 2
    ks = jax.random.split(k_data, 4)
    # network outputs: camera(7: quat+t) + expression(29) + illumination(27)
    pred_camera_exp = jax.random.normal(ks[0], (B, 63), jnp.float32)
    pred_shape = 0.1 * jax.random.normal(ks[1], (B, DIM_SHP), jnp.float32)
    gt_lable = {
        "lm": jax.random.normal(ks[2], (B, 2, N_LM), jnp.float32),
        "shape": 0.1 * jax.random.normal(ks[3], (B, DIM_SHP), jnp.float32),
    }

    fwd = jax.jit(mixed_loss_forward)
    loss = fwd(params, pred_camera_exp, pred_shape, gt_lable)
    jax.block_until_ready(loss)
    assert loss.shape == () and bool(jnp.isfinite(loss))
    print("KERNEL_OK")
</pallas_src>

<mosaic_0001>
module attributes {stable_mosaic.version = 11 : i64} {
  func.func @_mixed_loss_kernel(%arg0: memref<2x128xf32, #tpu.memory_space<vmem>>, %arg1: memref<2x7xf32, #tpu.memory_space<vmem>>, %arg2: memref<128x384xbf16, #tpu.memory_space<vmem>>, %arg3: memref<1x384xf32, #tpu.memory_space<vmem>>, %arg4: memref<2x2x68xf32, #tpu.memory_space<vmem>>, %arg5: memref<8x128xf32, #tpu.memory_space<vmem>>) attributes {dimension_semantics = [], scalar_prefetch = 0 : i64, scratch_operands = 0 : i64, tpu.core_type = #tpu.core_type<tc>} {
    %c0 = arith.constant 0 : index
    %c0_0 = arith.constant 0 : index
    %0 = vector.load %arg0[%c0, %c0_0] : memref<2x128xf32, #tpu.memory_space<vmem>>, vector<2x128xf32>
    %1 = arith.truncf %0 : vector<2x128xf32> to vector<2x128xbf16>
    %c0_1 = arith.constant 0 : index
    %c0_2 = arith.constant 0 : index
    %2 = vector.load %arg2[%c0_1, %c0_2] : memref<128x384xbf16, #tpu.memory_space<vmem>>, vector<128x384xbf16>
    %cst = arith.constant dense<0.000000e+00> : vector<2x384xf32>
    %3 = tpu.matmul %1, %2, %cst {dimension_numbers = #tpu.dot_dimension_numbers<[1], [0], [0], [1], [0, 0, 1, 1], [], []>} : vector<2x128xbf16>, vector<128x384xbf16>, vector<2x384xf32> -> vector<2x384xf32>
    %c0_3 = arith.constant 0 : index
    %c0_4 = arith.constant 0 : index
    %4 = vector.load %arg3[%c0_3, %c0_4] : memref<1x384xf32, #tpu.memory_space<vmem>>, vector<1x384xf32>
    %5 = vector.broadcast %4 : vector<1x384xf32> to vector<2x384xf32>
    %6 = arith.addf %3, %5 : vector<2x384xf32>
    %7 = vector.extract_strided_slice %6 {offsets = [0, 0], sizes = [2, 128], strides = [1, 1]} : vector<2x384xf32> to vector<2x128xf32>
    %8 = vector.extract_strided_slice %6 {offsets = [0, 128], sizes = [2, 128], strides = [1, 1]} : vector<2x384xf32> to vector<2x128xf32>
    %9 = vector.extract_strided_slice %6 {offsets = [0, 256], sizes = [2, 128], strides = [1, 1]} : vector<2x384xf32> to vector<2x128xf32>
    %c0_5 = arith.constant 0 : index
    %c0_6 = arith.constant 0 : index
    %10 = vector.load %arg1[%c0_5, %c0_6] : memref<2x7xf32, #tpu.memory_space<vmem>>, vector<2x7xf32>
    %11 = vector.extract_strided_slice %10 {offsets = [0, 0], sizes = [2, 1], strides = [1, 1]} : vector<2x7xf32> to vector<2x1xf32>
    %12 = vector.extract_strided_slice %10 {offsets = [0, 1], sizes = [2, 1], strides = [1, 1]} : vector<2x7xf32> to vector<2x1xf32>
    %13 = vector.extract_strided_slice %10 {offsets = [0, 2], sizes = [2, 1], strides = [1, 1]} : vector<2x7xf32> to vector<2x1xf32>
    %14 = vector.extract_strided_slice %10 {offsets = [0, 3], sizes = [2, 1], strides = [1, 1]} : vector<2x7xf32> to vector<2x1xf32>
    %15 = vector.extract_strided_slice %10 {offsets = [0, 4], sizes = [2, 1], strides = [1, 1]} : vector<2x7xf32> to vector<2x1xf32>
    %16 = vector.extract_strided_slice %10 {offsets = [0, 5], sizes = [2, 1], strides = [1, 1]} : vector<2x7xf32> to vector<2x1xf32>
    %17 = arith.mulf %11, %11 : vector<2x1xf32>
    %18 = arith.mulf %12, %12 : vector<2x1xf32>
    %19 = arith.addf %17, %18 : vector<2x1xf32>
    %20 = arith.mulf %13, %13 : vector<2x1xf32>
    %21 = arith.addf %19, %20 : vector<2x1xf32>
    %22 = arith.mulf %14, %14 : vector<2x1xf32>
    %23 = arith.addf %21, %22 : vector<2x1xf32>
    %cst_7 = arith.constant 1.000000e-16 : f32
    %24 = vector.broadcast %cst_7 : f32 to vector<2x1xf32>
    %25 = arith.maximumf %23, %24 : vector<2x1xf32>
    %26 = math.rsqrt %25 : vector<2x1xf32>
    %27 = arith.mulf %11, %26 : vector<2x1xf32>
    %28 = arith.mulf %12, %26 : vector<2x1xf32>
    %29 = arith.mulf %13, %26 : vector<2x1xf32>
    %30 = arith.mulf %14, %26 : vector<2x1xf32>
    %31 = arith.mulf %27, %27 : vector<2x1xf32>
    %32 = arith.mulf %28, %28 : vector<2x1xf32>
    %33 = arith.addf %31, %32 : vector<2x1xf32>
    %34 = arith.mulf %29, %29 : vector<2x1xf32>
    %35 = arith.subf %33, %34 : vector<2x1xf32>
    %36 = arith.mulf %30, %30 : vector<2x1xf32>
    %37 = arith.subf %35, %36 : vector<2x1xf32>
    %38 = arith.mulf %28, %29 : vector<2x1xf32>
    %39 = arith.mulf %27, %30 : vector<2x1xf32>
    %40 = arith.subf %38, %39 : vector<2x1xf32>
    %cst_8 = arith.constant 2.000000e+00 : f32
    %41 = vector.broadcast %cst_8 : f32 to vector<2x1xf32>
    %42 = arith.mulf %41, %40 : vector<2x1xf32>
    %43 = arith.mulf %28, %30 : vector<2x1xf32>
    %44 = arith.mulf %27, %29 : vector<2x1xf32>
    %45 = arith.addf %43, %44 : vector<2x1xf32>
    %cst_9 = arith.constant 2.000000e+00 : f32
    %46 = vector.broadcast %cst_9 : f32 to vector<2x1xf32>
    %47 = arith.mulf %46, %45 : vector<2x1xf32>
    %48 = arith.mulf %28, %29 : vector<2x1xf32>
    %49 = arith.mulf %27, %30 : vector<2x1xf32>
    %50 = arith.addf %48, %49 : vector<2x1xf32>
    %cst_10 = arith.constant 2.000000e+00 : f32
    %51 = vector.broadcast %cst_10 : f32 to vector<2x1xf32>
    %52 = arith.mulf %51, %50 : vector<2x1xf32>
    %53 = arith.mulf %27, %27 : vector<2x1xf32>
    %54 = arith.mulf %28, %28 : vector<2x1xf32>
    %55 = arith.subf %53, %54 : vector<2x1xf32>
    %56 = arith.mulf %29, %29 : vector<2x1xf32>
    %57 = arith.addf %55, %56 : vector<2x1xf32>
    %58 = arith.mulf %30, %30 : vector<2x1xf32>
    %59 = arith.subf %57, %58 : vector<2x1xf32>
    %60 = arith.mulf %29, %30 : vector<2x1xf32>
    %61 = arith.mulf %27, %28 : vector<2x1xf32>
    %62 = arith.subf %60, %61 : vector<2x1xf32>
    %cst_11 = arith.constant 2.000000e+00 : f32
    %63 = vector.broadcast %cst_11 : f32 to vector<2x1xf32>
    %64 = arith.mulf %63, %62 : vector<2x1xf32>
    %65 = vector.broadcast %37 : vector<2x1xf32> to vector<2x128xf32>
    %66 = arith.mulf %65, %7 : vector<2x128xf32>
    %67 = vector.broadcast %42 : vector<2x1xf32> to vector<2x128xf32>
    %68 = arith.mulf %67, %8 : vector<2x128xf32>
    %69 = arith.addf %66, %68 : vector<2x128xf32>
    %70 = vector.broadcast %47 : vector<2x1xf32> to vector<2x128xf32>
    %71 = arith.mulf %70, %9 : vector<2x128xf32>
    %72 = arith.addf %69, %71 : vector<2x128xf32>
    %73 = vector.broadcast %15 : vector<2x1xf32> to vector<2x128xf32>
    %74 = arith.addf %72, %73 : vector<2x128xf32>
    %75 = vector.extract_strided_slice %74 {offsets = [0, 0], sizes = [2, 68], strides = [1, 1]} : vector<2x128xf32> to vector<2x68xf32>
    %76 = vector.broadcast %52 : vector<2x1xf32> to vector<2x128xf32>
    %77 = arith.mulf %76, %7 : vector<2x128xf32>
    %78 = vector.broadcast %59 : vector<2x1xf32> to vector<2x128xf32>
    %79 = arith.mulf %78, %8 : vector<2x128xf32>
    %80 = arith.addf %77, %79 : vector<2x128xf32>
    %81 = vector.broadcast %64 : vector<2x1xf32> to vector<2x128xf32>
    %82 = arith.mulf %81, %9 : vector<2x128xf32>
    %83 = arith.addf %80, %82 : vector<2x128xf32>
    %84 = vector.broadcast %16 : vector<2x1xf32> to vector<2x128xf32>
    %85 = arith.addf %83, %84 : vector<2x128xf32>
    %86 = vector.extract_strided_slice %85 {offsets = [0, 0], sizes = [2, 68], strides = [1, 1]} : vector<2x128xf32> to vector<2x68xf32>
    %c0_12 = arith.constant 0 : index
    %c0_13 = arith.constant 0 : index
    %c0_14 = arith.constant 0 : index
    %87 = vector.load %arg4[%c0_12, %c0_13, %c0_14] : memref<2x2x68xf32, #tpu.memory_space<vmem>>, vector<1x2x68xf32>
    %88 = vector.shape_cast %87 : vector<1x2x68xf32> to vector<2x68xf32>
    %89 = arith.subf %75, %88 : vector<2x68xf32>
    %c1 = arith.constant 1 : index
    %c0_15 = arith.constant 0 : index
    %c0_16 = arith.constant 0 : index
    %90 = vector.load %arg4[%c1, %c0_15, %c0_16] : memref<2x2x68xf32, #tpu.memory_space<vmem>>, vector<1x2x68xf32>
    %91 = vector.shape_cast %90 : vector<1x2x68xf32> to vector<2x68xf32>
    %92 = arith.subf %86, %91 : vector<2x68xf32>
    %93 = arith.mulf %89, %89 : vector<2x68xf32>
    %cst_17 = arith.constant dense<0.000000e+00> : vector<2xf32>
    %94 = vector.multi_reduction <add>, %93, %cst_17 [1] : vector<2x68xf32> to vector<2xf32>
    %95 = vector.shape_cast %94 : vector<2xf32> to vector<2x1xf32>
    %96 = arith.mulf %92, %92 : vector<2x68xf32>
    %cst_18 = arith.constant dense<0.000000e+00> : vector<2xf32>
    %97 = vector.multi_reduction <add>, %96, %cst_18 [1] : vector<2x68xf32> to vector<2xf32>
    %98 = vector.shape_cast %97 : vector<2xf32> to vector<2x1xf32>
    %99 = arith.addf %95, %98 : vector<2x1xf32>
    %cst_19 = arith.constant 0.0073529412 : f32
    %100 = vector.broadcast %cst_19 : f32 to vector<2x1xf32>
    %101 = arith.mulf %99, %100 : vector<2x1xf32>
    %102 = arith.mulf %0, %0 : vector<2x128xf32>
    %cst_20 = arith.constant dense<0.000000e+00> : vector<2xf32>
    %103 = vector.multi_reduction <add>, %102, %cst_20 [1] : vector<2x128xf32> to vector<2xf32>
    %104 = vector.shape_cast %103 : vector<2xf32> to vector<2x1xf32>
    %cst_21 = arith.constant 1.000000e+00 : f32
    %105 = vector.broadcast %cst_21 : f32 to vector<2x1xf32>
    %106 = arith.mulf %105, %104 : vector<2x1xf32>
    %107 = arith.addf %101, %106 : vector<2x1xf32>
    %108 = vector.shape_cast %107 : vector<2x1xf32> to vector<1x2x1xf32>
    %cst_22 = arith.constant dense<0.000000e+00> : vector<1xf32>
    %109 = vector.multi_reduction <add>, %108, %cst_22 [1, 2] : vector<1x2x1xf32> to vector<1xf32>
    %110 = vector.shape_cast %109 : vector<1xf32> to vector<1x1x1xf32>
    %111 = vector.extract %110[0, 0, 0] : f32 from vector<1x1x1xf32>
    %cst_23 = arith.constant 2.000000e+00 : f32
    %112 = arith.divf %111, %cst_23 : f32
    %113 = vector.broadcast %112 : f32 to vector<8x128xf32>
    %c0_24 = arith.constant 0 : index
    %c0_25 = arith.constant 0 : index
    %114 = vector.load %arg5[%c0_24, %c0_25] : memref<8x128xf32, #tpu.memory_space<vmem>>, vector<8x128xf32>
    tpu.vector_store %arg5[%c0_24, %c0_25], %113 {strides = array<i32>} : memref<8x128xf32, #tpu.memory_space<vmem>>, vector<8x128xf32>,
    return
  }
}

</mosaic_0001>

<llo_original>
// kernel: mixed_loss_forward.1
$region0: #{mixed_loss_forward.1}
  #allocation0 [shape = 'u32[]', space=smem, size = 0x4, offset = 0x4, fixed_abs, tag = 'smem constant byte address 0x4 - core index']
  #allocation1 [shape = 'u32[144,128]{1,0:T(1,128)}', space=vmem, size = 0x12000, scoped, tag = 'internal scratch']
  %s0 = inlined_call_operand.vmem [shape: f32[2,128], index: 0, kind: input, shape index: {}]
  %s1 = inlined_call_operand.vmem [shape: f32[2,7], index: 1, kind: input, shape index: {}]
  %s2 = inlined_call_operand.hbm [shape: bf16[128,384], index: 2, kind: input, shape index: {}]
  %s3 = inlined_call_operand.vmem [shape: f32[1,384], index: 3, kind: input, shape index: {}]
  %s4 = inlined_call_operand.vmem [shape: f32[2,2,68], index: 4, kind: input, shape index: {}]
  %s5 = inlined_call_operand.vmem [shape: f32[8,128], index: 5, kind: output, shape index: {}]
  %s6 = sld [smem:[#allocation0]]
  $region34: #{mixed_loss_forward.1} parent=0
    _
  %s8 = ssub.s32 1, %s6
  %s9 = scalar_select 0, %s8, %s6
  $region1: #{mixed_loss_forward.1} parent=0
    #allocation2 [shape = 'u8[98304]{0}', space=vmem, size = 0x18000, scoped, tag = 'input window, operand 2, single buffered']
    #allocation3 [shape = 's32[1]{0}', space=sflag, size = 0x4, scoped, tag = 'scoped memory for mixed_loss_forward.1']
    %10 = vsyncpa [#allocation3], 0
    // Predicated region
    $region2: #{mixed_loss_forward.1} parent=1 // pred_check
      _
    $region3: #{mixed_loss_forward.1} parent=1 // pred_check_branch
      %12 = sbr.rel (0) target = $region5
    $region4: #{mixed_loss_forward.1} parent=1 // pred_region
      _
    $region5: #{mixed_loss_forward.1} parent=1 // pred_fallthru
      _
    // Predicated region
    $region6: #{mixed_loss_forward.1} parent=1 // pred_check
      _
    $region7: #{mixed_loss_forward.1} parent=1 // pred_check_branch
      %14 = sbr.rel (0) target = $region9
    $region8: #{mixed_loss_forward.1} parent=1 // pred_region
      _
    $region9: #{mixed_loss_forward.1} parent=1 // pred_fallthru
      _
    // Predicated region
    $region10: #{mixed_loss_forward.1} parent=1 // pred_check
      _
    $region11: #{mixed_loss_forward.1} parent=1 // pred_check_branch
      %16 = sbr.rel (0) target = $region13
    $region12: #{mixed_loss_forward.1} parent=1 // pred_region
      %s18 = ssub.s32 3072, 3072
      %19 = vsyncadd [#allocation3], %s18
      %s20 = sshll.u32 [#allocation2], 4
      %s21 = int_to_ptr.vmem [resolvable:$true] %s20
      %26 = dma.hbm_to_vmem [thread:$0]  %s2, 3072, %s21, [#allocation3], 192, 192, 12
    $region13: #{mixed_loss_forward.1} parent=1 // pred_fallthru
      _
    // Predicated region
    $region14: #{mixed_loss_forward.1} parent=1 // pred_check
      _
    $region15: #{mixed_loss_forward.1} parent=1 // pred_check_branch
      %28 = sbr.rel (0) target = $region17
    $region16: #{mixed_loss_forward.1} parent=1 // pred_region
      _
    $region17: #{mixed_loss_forward.1} parent=1 // pred_fallthru
      _
    // Predicated region
    $region18: #{mixed_loss_forward.1} parent=1 // pred_check
      _
    $region19: #{mixed_loss_forward.1} parent=1 // pred_check_branch
      %30 = sbr.rel (0) target = $region21
    $region20: #{mixed_loss_forward.1} parent=1 // pred_region
      _
    $region21: #{mixed_loss_forward.1} parent=1 // pred_fallthru
      _
    // Predicated region
    $region22: #{mixed_loss_forward.1} parent=1 // pred_check
      _
    $region23: #{mixed_loss_forward.1} parent=1 // pred_check_branch
      %32 = sbr.rel (0) target = $region25
    $region24: #{mixed_loss_forward.1} parent=1 // pred_region
      %33 = dma.done [#allocation3], 3072
    $region25: #{mixed_loss_forward.1} parent=1 // pred_fallthru
      _
    %v35 = vld [vmem:[%s0] sm:$0x3]
    %v36 = vpack.c.bf16 %v35, %v35
    %v37 = vld [vmem:[#allocation2] sm:$0xff]
    %v38 = vld [vmem:[#allocation2 + $0x8] sm:$0xf]
    %v39 = vld [vmem:[#allocation2 + $0xc] sm:$0xff]
    %v40 = vld [vmem:[#allocation2 + $0x14] sm:$0xf]
    %v41 = vld [vmem:[#allocation2 + $0x18] sm:$0xff]
    %v42 = vld [vmem:[#allocation2 + $0x20] sm:$0xf]
    %v43 = vld [vmem:[#allocation2 + $0x24] sm:$0xff]
    %v44 = vld [vmem:[#allocation2 + $0x2c] sm:$0xf]
    %v45 = vld [vmem:[#allocation2 + $0x30] sm:$0xff]
    %v46 = vld [vmem:[#allocation2 + $0x38] sm:$0xf]
    %v47 = vld [vmem:[#allocation2 + $0x3c] sm:$0xff]
    %v48 = vld [vmem:[#allocation2 + $0x44] sm:$0xf]
    %v49 = vld [vmem:[#allocation2 + $0x48] sm:$0xff]
    %v50 = vld [vmem:[#allocation2 + $0x50] sm:$0xf]
    %v51 = vld [vmem:[#allocation2 + $0x54] sm:$0xff]
    %v52 = vld [vmem:[#allocation2 + $0x5c] sm:$0xf]
    %v53 = vld [vmem:[#allocation2 + $0x60] sm:$0xff]
    %v54 = vld [vmem:[#allocation2 + $0x68] sm:$0xf]
    %v55 = vld [vmem:[#allocation2 + $0x6c] sm:$0xff]
    %v56 = vld [vmem:[#allocation2 + $0x74] sm:$0xf]
    %v57 = vld [vmem:[#allocation2 + $0x78] sm:$0xff]
    %v58 = vld [vmem:[#allocation2 + $0x80] sm:$0xf]
    %v59 = vld [vmem:[#allocation2 + $0x84] sm:$0xff]
    %v60 = vld [vmem:[#allocation2 + $0x8c] sm:$0xf]
    %v61 = vld [vmem:[#allocation2 + $0x90] sm:$0xff]
    %v62 = vld [vmem:[#allocation2 + $0x98] sm:$0xf]
    %v63 = vld [vmem:[#allocation2 + $0x9c] sm:$0xff]
    %v64 = vld [vmem:[#allocation2 + $0xa4] sm:$0xf]
    %v65 = vld [vmem:[#allocation2 + $0xa8] sm:$0xff]
    %v66 = vld [vmem:[#allocation2 + $0xb0] sm:$0xf]
    %v67 = vld [vmem:[#allocation2 + $0xb4] sm:$0xff]
    %v68 = vld [vmem:[#allocation2 + $0xbc] sm:$0xf]
    %v69 = vld [vmem:[%s3] sm:$0x7]
    %v71 = vlaneseq
    %v72 = vshrl.u32 %v71, 7
    %v73 = vsub.s32 0, %v72
    %v74 = vrot.slane %v69, %v73
    %v75 = vlaneseq
    %v76 = vshrl.u32 %v75, 7
    %v77 = vsub.s32 1, %v76
    %v78 = vrot.slane %v69, %v77
    %v79 = vlaneseq
    %v80 = vshrl.u32 %v79, 7
    %v81 = vsub.s32 2, %v80
    %v82 = vrot.slane %v69, %v81
    %v118 = vunpack.c.l.b16 %v37
    %v119 = vunpack.c.h.b16 %v37
    %v120 = vunpack.c.l.b16 %v38
    %v121 = vunpack.c.l.b16 %v39
    %v122 = vunpack.c.h.b16 %v39
    %v123 = vunpack.c.l.b16 %v40
    %v124 = vunpack.c.l.b16 %v41
    %v125 = vunpack.c.h.b16 %v41
    %v126 = vunpack.c.l.b16 %v42
    %v127 = vunpack.c.l.b16 %v43
    %v128 = vunpack.c.h.b16 %v43
    %v129 = vunpack.c.l.b16 %v44
    %v130 = vunpack.c.l.b16 %v45
    %v131 = vunpack.c.h.b16 %v45
    %v132 = vunpack.c.l.b16 %v46
    %v133 = vunpack.c.l.b16 %v47
    %v134 = vunpack.c.h.b16 %v47
    %v135 = vunpack.c.l.b16 %v48
    %v136 = vunpack.c.l.b16 %v49
    %v137 = vunpack.c.h.b16 %v49
    %v138 = vunpack.c.l.b16 %v50
    %v139 = vunpack.c.l.b16 %v51
    %v140 = vunpack.c.h.b16 %v51
    %v141 = vunpack.c.l.b16 %v52
    %v142 = vunpack.c.l.b16 %v53
    %v143 = vunpack.c.h.b16 %v53
    %v144 = vunpack.c.l.b16 %v54
    %v145 = vunpack.c.l.b16 %v55
    %v146 = vunpack.c.h.b16 %v55
    %v147 = vunpack.c.l.b16 %v56
    %v148 = vunpack.c.l.b16 %v57
    %v149 = vunpack.c.h.b16 %v57
    %v150 = vunpack.c.l.b16 %v58
    %v151 = vunpack.c.l.b16 %v59
    %v152 = vunpack.c.h.b16 %v59
    %v153 = vunpack.c.l.b16 %v60
    %v154 = vunpack.c.l.b16 %v61
    %v155 = vunpack.c.h.b16 %v61
    %v156 = vunpack.c.l.b16 %v62
    %v157 = vunpack.c.l.b16 %v63
    %v158 = vunpack.c.h.b16 %v63
    %v159 = vunpack.c.l.b16 %v64
    %v160 = vunpack.c.l.b16 %v65
    %v161 = vunpack.c.h.b16 %v65
    %v162 = vunpack.c.l.b16 %v66
    %v163 = vunpack.c.l.b16 %v67
    %v164 = vunpack.c.h.b16 %v67
    %v165 = vunpack.c.l.b16 %v68
    %v166 = vpack.c.b16 %v121, %v118
    %v167 = vpack.c.b16 %v122, %v119
    %v168 = vpack.c.b16 %v123, %v120
    %v169 = vpack.c.b16 %v127, %v124
    %v170 = vpack.c.b16 %v128, %v125
    %v171 = vpack.c.b16 %v129, %v126
    %v172 = vpack.c.b16 %v133, %v130
    %v173 = vpack.c.b16 %v134, %v131
    %v174 = vpack.c.b16 %v135, %v132
    %v175 = vpack.c.b16 %v139, %v136
    %v176 = vpack.c.b16 %v140, %v137
    %v177 = vpack.c.b16 %v141, %v138
    %v178 = vpack.c.b16 %v145, %v142
    %v179 = vpack.c.b16 %v146, %v143
    %v180 = vpack.c.b16 %v147, %v144
    %v181 = vpack.c.b16 %v151, %v148
    %v182 = vpack.c.b16 %v152, %v149
    %v183 = vpack.c.b16 %v153, %v150
    %v184 = vpack.c.b16 %v157, %v154
    %v185 = vpack.c.b16 %v158, %v155
    %v186 = vpack.c.b16 %v159, %v156
    %v187 = vpack.c.b16 %v163, %v160
    %v188 = vpack.c.b16 %v164, %v161
    %v189 = vpack.c.b16 %v165, %v162
    %214 = vmatprep.subr.bf16.mxu0 %v188
    %215 = vmatpush1.bf16.msra.mxu0 %v187
    %216 = vmatprep.subr.bf16.mxu0 %v185
    %217 = vmatpush1.bf16.msra.mxu0 %v184
    %218 = vmatprep.subr.bf16.mxu0 %v182
    %219 = vmatpush1.bf16.msra.mxu0 %v181
    %220 = vmatprep.subr.bf16.mxu0 %v179
    %221 = vmatpush1.bf16.msra.mxu0 %v178
    %222 = vmatprep.subr.bf16.mxu0 %v176
    %223 = vmatpush1.bf16.msra.mxu0 %v175
    %224 = vmatprep.subr.bf16.mxu0 %v173
    %225 = vmatpush1.bf16.msra.mxu0 %v172
    %226 = vmatprep.subr.bf16.mxu0 %v170
    %227 = vmatpush1.bf16.msra.mxu0 %v169
    %228 = vmatprep.subr.bf16.mxu0 %v167
    %229 = vmatpush1.bf16.msra.mxu0 %v166
    %230 = vmatprep.subr.bf16.mxu0 0
    %231 = vmatpush2.bf16.msra.mxu0 0
    %232 = vmatprep.subr.bf16.mxu0 0
    %233 = vmatpush2.bf16.msra.mxu0 0
    %234 = vmatprep.subr.bf16.mxu0 0
    %235 = vmatpush2.bf16.msra.mxu0 0
    %236 = vmatprep.subr.bf16.mxu0 0
    %237 = vmatpush2.bf16.msra.mxu0 0
    %238 = vmatprep.subr.bf16.mxu0 0
    %239 = vmatpush2.bf16.msra.mxu0 0
    %240 = vmatprep.subr.bf16.mxu0 0
    %241 = vmatpush2.bf16.msra.mxu0 0
    %242 = vmatprep.subr.bf16.mxu0 0
    %243 = vmatpush2.bf16.msra.mxu0 0
    %244 = vmatprep.subr.bf16.mxu0 0
    %245 = vmatpush2.bf16.msra.mxu0 0
    %246 = vmatprep.mubr.bf16.mxu0 0
    %247 = vmatmul.mubr.bf16.gmra.mxu0 %v36
    %v248 = vpop.f32.mrf.mxu0
    %v249 = vadd.f32 %v74, %v248
    %v250 = vpop.f32.mrf.mxu0
    %v251 = vadd.f32 %v78, %v250
    %v252 = vpop.f32.mrf.mxu0
    %v253 = vpop.f32.mrf.mxu0
    %254 = vdwg.mxu0
    %255 = vmatprep.subr.bf16.mxu0 0
    %256 = vmatpush1.bf16.msra.mxu0 %v189
    %257 = vmatprep.subr.bf16.mxu0 0
    %258 = vmatpush1.bf16.msra.mxu0 %v186
    %259 = vmatprep.subr.bf16.mxu0 0
    %260 = vmatpush1.bf16.msra.mxu0 %v183
    %261 = vmatprep.subr.bf16.mxu0 0
    %262 = vmatpush1.bf16.msra.mxu0 %v180
    %263 = vmatprep.subr.bf16.mxu0 0
    %264 = vmatpush1.bf16.msra.mxu0 %v177
    %265 = vmatprep.subr.bf16.mxu0 0
    %266 = vmatpush1.bf16.msra.mxu0 %v174
    %267 = vmatprep.subr.bf16.mxu0 0
    %268 = vmatpush1.bf16.msra.mxu0 %v171
    %269 = vmatprep.subr.bf16.mxu0 0
    %270 = vmatpush1.bf16.msra.mxu0 %v168
    %271 = vmatprep.subr.bf16.mxu0 0
    %272 = vmatpush2.bf16.msra.mxu0 0
    %273 = vmatprep.subr.bf16.mxu0 0
    %274 = vmatpush2.bf16.msra.mxu0 0
    %275 = vmatprep.subr.bf16.mxu0 0
    %276 = vmatpush2.bf16.msra.mxu0 0
    %277 = vmatprep.subr.bf16.mxu0 0
    %278 = vmatpush2.bf16.msra.mxu0 0
    %279 = vmatprep.subr.bf16.mxu0 0
    %280 = vmatpush2.bf16.msra.mxu0 0
    %281 = vmatprep.subr.bf16.mxu0 0
    %282 = vmatpush2.bf16.msra.mxu0 0
    %283 = vmatprep.subr.bf16.mxu0 0
    %284 = vmatpush2.bf16.msra.mxu0 0
    %285 = vmatprep.subr.bf16.mxu0 0
    %286 = vmatpush2.bf16.msra.mxu0 0
    %287 = vmatprep.mubr.bf16.mxu0 0
    %288 = vmatmul.mubr.bf16.gmra.mxu0 %v36
    %v289 = vpop.f32.mrf.mxu0
    %v290 = vadd.f32 %v82, %v289
    %v291 = vpop.f32.mrf.mxu0
    %v292 = vpop.f32.mrf.mxu0
    %v293 = vpop.f32.mrf.mxu0
    %294 = vdwg.mxu0
    %v295 = vld [vmem:[%s1] sm:$0x3]
    %v296 = vmul.f32 %v295, %v295
    %298 = vrot.lane.b32.xlu0 %v296, 127
    %v299 = vpop.permute.xlu0 %298
    %v301 = vadd.f32 %v296, %v299
    %302 = vrot.lane.b32.xlu0 %v296, 126
    %v303 = vpop.permute.xlu0 %302
    %v305 = vadd.f32 %v301, %v303
    %306 = vrot.lane.b32.xlu0 %v296, 125
    %v307 = vpop.permute.xlu0 %306
    %v309 = vadd.f32 %v305, %v307
    %v310 = vmax.f32 %v309, 1e-16
    %v311 = vrsqrt.pop %v310
    %v312 = vmul.f32 %v295, %v311
    %314 = vrot.lane.b32.xlu0 %v311, 1
    %v315 = vpop.permute.xlu0 %314
    %v317 = vmul.f32 %v295, %v315
    %318 = vrot.lane.b32.xlu0 %v311, 2
    %v319 = vpop.permute.xlu0 %318
    %v321 = vmul.f32 %v295, %v319
    %322 = vrot.lane.b32.xlu0 %v311, 3
    %v323 = vpop.permute.xlu0 %322
    %v325 = vmul.f32 %v295, %v323
    %v326 = vmul.f32 %v312, %v312
    %v327 = vmul.f32 %v317, %v317
    %329 = vrot.lane.b32.xlu0 %v327, 127
    %v330 = vpop.permute.xlu0 %329
    %v332 = vadd.f32 %v326, %v330
    %v333 = vmul.f32 %v321, %v321
    %335 = vrot.lane.b32.xlu0 %v333, 126
    %v336 = vpop.permute.xlu0 %335
    %v338 = vsub.f32 %v332, %v336
    %v339 = vmul.f32 %v325, %v325
    %341 = vrot.lane.b32.xlu0 %v339, 125
    %v342 = vpop.permute.xlu0 %341
    %v344 = vsub.f32 %v338, %v342
    %346 = vrot.lane.b32.xlu0 %v321, 127
    %v347 = vpop.permute.xlu0 %346
    %v349 = vmul.f32 %v317, %v347
    %351 = vrot.lane.b32.xlu0 %v325, 125
    %v352 = vpop.permute.xlu0 %351
    %v354 = vmul.f32 %v312, %v352
    %356 = vrot.lane.b32.xlu0 %v354, 1
    %v357 = vpop.permute.xlu0 %356
    %v359 = vsub.f32 %v349, %v357
    %v360 = vmul.f32 %v359, 2.0
    %361 = vrot.lane.b32.xlu0 %v325, 126
    %v362 = vpop.permute.xlu0 %361
    %v364 = vmul.f32 %v317, %v362
    %365 = vrot.lane.b32.xlu0 %v321, 126
    %v366 = vpop.permute.xlu0 %365
    %v368 = vmul.f32 %v312, %v366
    %370 = vrot.lane.b32.xlu0 %v368, 1
    %v371 = vpop.permute.xlu0 %370
    %v373 = vadd.f32 %v364, %v371
    %v374 = vmul.f32 %v373, 2.0
    %v375 = vadd.f32 %v349, %v357
    %v376 = vmul.f32 %v375, 2.0
    %v377 = vsub.f32 %v326, %v330
    %v378 = vadd.f32 %v377, %v336
    %v379 = vsub.f32 %v378, %v342
    %380 = vrot.lane.b32.xlu0 %v325, 127
    %v381 = vpop.permute.xlu0 %380
    %v383 = vmul.f32 %v321, %v381
    %385 = vrot.lane.b32.xlu0 %v317, 127
    %v386 = vpop.permute.xlu0 %385
    %v388 = vmul.f32 %v312, %v386
    %390 = vrot.lane.b32.xlu0 %v388, 2
    %v391 = vpop.permute.xlu0 %390
    %v393 = vsub.f32 %v383, %v391
    %v394 = vmul.f32 %v393, 2.0
    %396 = vset.pattern.permute.xlu0 0
    %397 = vperm.xlu0 %396, %v344
    %v398 = vpop.permute.xlu0 %397
    %v400 = vmul.f32 %v398, %v249
    %402 = vset.pattern.permute.xlu0 1
    %403 = vperm.xlu0 %402, %v360
    %v404 = vpop.permute.xlu0 %403
    %v406 = vmul.f32 %v404, %v251
    %v407 = vadd.f32 %v400, %v406
    %409 = vset.pattern.permute.xlu0 1
    %410 = vperm.xlu0 %409, %v374
    %v411 = vpop.permute.xlu0 %410
    %v413 = vmul.f32 %v411, %v290
    %v414 = vadd.f32 %v407, %v413
    %416 = vset.pattern.permute.xlu0 4
    %417 = vperm.xlu0 %416, %v295
    %v418 = vpop.permute.xlu0 %417
    %v420 = vadd.f32 %v414, %v418
    %422 = vset.pattern.permute.xlu0 1
    %423 = vperm.xlu0 %422, %v376
    %v424 = vpop.permute.xlu0 %423
    %v426 = vmul.f32 %v424, %v249
    %428 = vset.pattern.permute.xlu0 0
    %429 = vperm.xlu0 %428, %v379
    %v430 = vpop.permute.xlu0 %429
    %v432 = vmul.f32 %v430, %v251
    %v433 = vadd.f32 %v426, %v432
    %435 = vset.pattern.permute.xlu0 2
    %436 = vperm.xlu0 %435, %v394
    %v437 = vpop.permute.xlu0 %436
    %v439 = vmul.f32 %v437, %v290
    %v440 = vadd.f32 %v433, %v439
    %441 = vset.pattern.permute.xlu0 5
    %442 = vperm.xlu0 %441, %v295
    %v443 = vpop.permute.xlu0 %442
    %v445 = vadd.f32 %v440, %v443
    %v446 = vld [vmem:[%s4] sm:$0x3]
    %v447 = vsub.f32 %v420, %v446
    %s448 = scalar_lea.vmem %s4, 2
    %v449 = vld [vmem:[%s448] sm:$0x3]
    %v450 = vsub.f32 %v445, %v449
    %v451 = vmul.f32 %v447, %v447
    %vm452 = vcmask 549888
    %v453 = vsel %vm452, %v451, 0.0
    %454 = vadd.xlane.f32.xlu0 %v453
    %v455 = vpop.xlane.xlu0 %454
    %v456 = vmul.f32 %v450, %v450
    %v457 = vsel %vm452, %v456, 0.0
    %458 = vadd.xlane.f32.xlu0 %v457
    %v459 = vpop.xlane.xlu0 %458
    %v460 = vadd.f32 %v455, %v459
    %v461 = vmul.f32 %v460, 0.007352941
    %v462 = vmul.f32 %v35, %v35
    %vm463 = vcmask 1041408
    %v464 = vsel %vm463, %v462, 0.0
    %465 = vadd.xlane.f32.xlu0 %v464
    %v466 = vpop.xlane.xlu0 %465
    %v467 = vadd.f32 %v461, %v466
    %vm468 = vcmask 1024
    %v469 = vsel %vm468, %v467, 0.0
    %470 = vadd.xlane.f32.xlu0 %v469
    %v471 = vpop.xlane.xlu0 %470
    %v472 = vrot.slane %v471, 4
    %v473 = vadd.f32 %v471, %v472
    %v474 = vrot.slane %v473, 2
    %v475 = vadd.f32 %v473, %v474
    %v476 = vrot.slane %v475, 1
    %v477 = vadd.f32 %v475, %v476
    %s478 = vtos %v477
    %v479 = vrcp.pop 2.0
    %s480 = vtos %v479
    %s481 = smul.f32 %s478, %s480
    %v482 = vstv %s481
    %483 = vst [vmem:[%s5] sm:$0xff] %v482
    // Predicated region
    $region26: #{mixed_loss_forward.1} parent=1 // pred_check
      _
    $region27: #{mixed_loss_forward.1} parent=1 // pred_check_branch
      %485 = sbr.rel (0) target = $region29
    $region28: #{mixed_loss_forward.1} parent=1 // pred_region
      _
    $region29: #{mixed_loss_forward.1} parent=1 // pred_fallthru
      _
    // Predicated region
    $region30: #{mixed_loss_forward.1} parent=1 // pred_check
      _
    $region31: #{mixed_loss_forward.1} parent=1 // pred_check_branch
      %487 = sbr.rel (0) target = $region33
    $region32: #{mixed_loss_forward.1} parent=1 // pred_region
      _
    $region33: #{mixed_loss_forward.1} parent=1 // pred_fallthru
      _
    %488 = vsyncpa [#allocation3], 1

</llo_original>
